<compile_context>
chip_gen: v7x
topology: tpu7x:2x2x1
jax: 0.10.0
libtpu: 0.0.40
codegen_flags: <defaults>
</compile_context>

<pallas_src>
import functools

import jax
import jax.numpy as jnp
from jax import lax
from jax.experimental import pallas as pl
from jax.experimental.pallas import tpu as pltpu

# Explicit scoped-VMEM limit: above the 16/32 MiB defaults, <= physical on
# v5e/v6e (128 MiB) and v7x (64 MiB).  Actual per-step working sets below are
# kept well under this by the tile / head-group choices.
_VMEM_LIMIT_BYTES = 64 * 1024 * 1024


# ---------------------------------------------------------------------------
# entmax_bisect (entmax-library semantics, ensure_sum_one=True).
# Pure jnp/lax so it is reused both inside the Pallas kernels and as the
# pure-JAX reference in __main__.
# ---------------------------------------------------------------------------
def _entmax_bisect(scores, alpha, n_iter=30):
    """alpha-entmax over the last axis via bisection.

    scores: (..., d) float32.
    alpha : python float (> 1; specialized at trace time — e.g. 1.5 becomes
            relu(z)**2, pure VALU) or a traced float32 scalar/array (> 1
            elementwise; general exp/log path).
    n_iter=30 is fp32-equivalent to the library default of 50 (the bracket
    width dm halves every step).
    """
    d = scores.shape[-1]
    static = isinstance(alpha, (int, float))

    if static:
        assert alpha > 1.0, "entmax_bisect requires alpha > 1"
        am1 = float(alpha) - 1.0
        inv = 1.0 / am1
        inv_int = int(round(inv))
        if abs(inv - inv_int) < 1e-6 and 1 <= inv_int <= 8:
            # alpha=1.5 -> p(z) = relu(z)**2 : no EUP exp/log on the hot path.
            def _p(z):
                zc = jnp.maximum(z, 0.0)
                r = zc
                for _ in range(inv_int - 1):
                    r = r * zc
                return r
        else:
            def _p(z):
                zc = jnp.maximum(z, 0.0)
                safe = jnp.where(zc > 0.0, zc, 1.0)
                return jnp.where(zc > 0.0, jnp.exp(inv * jnp.log(safe)), 0.0)
        dm0_val = 1.0 - float(d) ** (-am1)        # tau_hi - tau_lo
    else:
        # TODO(synk): dynamic alpha must be > 1 elementwise (entmax library
        # requirement); the alpha == 1 softmax limit is not handled.
        alpha = jnp.asarray(alpha, jnp.float32)
        am1 = alpha - 1.0
        inv_am1 = 1.0 / am1

        def _p(z):
            zc = jnp.maximum(z, 0.0)
            safe = jnp.where(zc > 0.0, zc, 1.0)
            return jnp.where(zc > 0.0, jnp.exp(inv_am1 * jnp.log(safe)), 0.0)

        dm0_val = 1.0 - jnp.exp(am1 * jnp.log(1.0 / d))

    xs = scores * am1
    max_s = jnp.max(xs, axis=-1, keepdims=True)
    tau_lo0 = max_s - 1.0                         # 1 ** (alpha - 1)
    dm0 = jnp.zeros_like(tau_lo0) + dm0_val

    # f(tau_lo) >= 0 by construction (the max element contributes exactly 1),
    # so the library's `f_m * f_lo >= 0` test reduces to `f_m >= 0`.
    # Carry only (tau_lo, dm, tau_m) — all (..., 1) — so no (..., d) tensor is
    # live across iterations (removes the per-iteration VMEM spills).
    def body(_, carry):
        tau_lo, dm, _ = carry
        dm = dm * 0.5
        tau_m = tau_lo + dm
        p_m = _p(xs - tau_m)
        f_m = jnp.sum(p_m, axis=-1, keepdims=True) - 1.0
        tau_lo = jnp.where(f_m >= 0.0, tau_m, tau_lo)
        return (tau_lo, dm, tau_m)

    _, _, tau_m = lax.fori_loop(0, n_iter, body, (tau_lo0, dm0, tau_lo0),
                                unroll=2)
    # Recompute p at the last midpoint (library semantics) and normalize with
    # an exact division so the weights sum to 1.
    p_m = _p(xs - tau_m)
    denom = jnp.sum(p_m, axis=-1, keepdims=True)
    return p_m / denom


# ---------------------------------------------------------------------------
# Pallas kernels
# ---------------------------------------------------------------------------
def _qkv_proj_kernel(x_ref, wq_ref, wk_ref, wv_ref, bq_ref, bk_ref, bv_ref,
                     q_ref, k_ref, v_ref):
    x = x_ref[...]
    for w_ref, b_ref, o_ref in ((wq_ref, bq_ref, q_ref),
                                (wk_ref, bk_ref, k_ref),
                                (wv_ref, bv_ref, v_ref)):
        o_ref[...] = (jnp.dot(x, w_ref[...],
                              preferred_element_type=jnp.float32)
                      + b_ref[...]).astype(o_ref.dtype)


def _attn_window_kernel(*refs, heads_per_block, head_dim, n_iter, static_alpha):
    # refs: [alpha_ref (SMEM, only if static_alpha is None)], q, k, v, o
    if static_alpha is None:
        alpha_ref, q_ref, k_ref, v_ref, o_ref = refs
    else:
        q_ref, k_ref, v_ref, o_ref = refs

    hg, hd = heads_per_block, head_dim
    inv_sqrt_hd = float(hd) ** -0.5
    g = pl.program_id(2)                        # head-group index

    # Static per-head loop: one (W, W) f32 scores tile live at a time
    # (in-kernel head tiling), everything 2-D (no 3-D relayouts), lane-dense
    # writes into the (W, hg*hd) output block.
    for h in range(hg):
        lo = h * hd
        qh = q_ref[:, lo:lo + hd]
        kh = k_ref[:, lo:lo + hd]
        vh = v_ref[:, lo:lo + hd]
        # q @ k^T, f32 accumulation; the 1/sqrt(hd) scale is applied to the
        # f32 scores (matches PyTorch: einsum(q, k) / sqrt(head_dim)).
        s = lax.dot_general(qh, kh, (((1,), (1,)), ((), ())),
                            preferred_element_type=jnp.float32) * inv_sqrt_hd
        if static_alpha is None:
            alpha_h = alpha_ref[g * hg + h]     # scalar read from SMEM
        else:
            alpha_h = static_alpha
        p = _entmax_bisect(s, alpha_h, n_iter=n_iter)           # (W, W) f32
        pv = jnp.dot(p.astype(vh.dtype), vh,
                     preferred_element_type=jnp.float32)        # (W, hd) f32
        o_ref[:, lo:lo + hd] = pv.astype(o_ref.dtype)


def _ln_linear_kernel(x_ref, g_ref, b_ref, w_ref, bias_ref, o_ref, *, eps):
    x = x_ref[...].astype(jnp.float32)               # (Tm, D)
    mean = jnp.mean(x, axis=-1, keepdims=True)
    xc = x - mean
    var = jnp.mean(xc * xc, axis=-1, keepdims=True)
    xn = xc * lax.rsqrt(var + eps)
    y = xn * g_ref[...] + b_ref[...]
    o_ref[...] = (jnp.dot(y.astype(w_ref.dtype), w_ref[...],
                          preferred_element_type=jnp.float32)
                  + bias_ref[...]).astype(o_ref.dtype)


# ---------------------------------------------------------------------------
# Wrappers (pallas_call plumbing)
# ---------------------------------------------------------------------------
def _qkv_proj(x, w_q, w_k, w_v, b_q, b_k, b_v, out_dtype, tile_m=512):
    """x: (M, K); w_*: (K, N).  Returns (q, k, v), each (M, N).

    x and each weight slab are DMA'd once (weight block indices are constant
    across the row-tile axis, so Pallas does not re-fetch them)."""
    M, K = x.shape
    N = w_q.shape[1]
    itemsize = jnp.dtype(x.dtype).itemsize
    tm = min(tile_m, M)
    # Keep the full weight slabs resident when they fit comfortably; fall back
    # to lane-aligned 512-wide column tiles otherwise.
    tn = N if (3 * K * N * itemsize <= 24 * 1024 * 1024 or N <= 512) else 512

    x_spec = pl.BlockSpec((tm, K), lambda i, j: (i, 0))
    w_spec = pl.BlockSpec((K, tn), lambda i, j: (0, j))
    b_spec = pl.BlockSpec((1, tn), lambda i, j: (0, j))
    o_spec = pl.BlockSpec((tm, tn), lambda i, j: (i, j))
    out_sds = jax.ShapeDtypeStruct((M, N), out_dtype)

    return pl.pallas_call(
        _qkv_proj_kernel,
        grid=(pl.cdiv(M, tm), pl.cdiv(N, tn)),
        in_specs=[x_spec, w_spec, w_spec, w_spec, b_spec, b_spec, b_spec],
        out_specs=(o_spec, o_spec, o_spec),
        out_shape=(out_sds, out_sds, out_sds),
        compiler_params=pltpu.CompilerParams(
            dimension_semantics=("parallel", "parallel"),
            vmem_limit_bytes=_VMEM_LIMIT_BYTES),
    )(x, w_q, w_k, w_v,
      b_q.reshape(1, N), b_k.reshape(1, N), b_v.reshape(1, N))


def _choose_heads_per_block(num_heads, head_dim, window, itemsize,
                            block_budget_bytes=8 * 1024 * 1024):
    """Largest head group with lane-aligned width whose double-buffered
    q/k/v/out blocks stay under a modest VMEM budget (the per-head loop inside
    the kernel already bounds the entmax working set to one (W, W) tile)."""
    cands = [hg for hg in range(num_heads, 0, -1)
             if num_heads % hg == 0
             and (hg == num_heads or (hg * head_dim) % 128 == 0)]
    for hg in cands:
        if 4 * 2 * window * hg * head_dim * itemsize <= block_budget_bytes:
            return hg
    return cands[-1]


def _window_attention(q, k, v, alpha, num_heads, head_dim, window, *,
                      n_iter=30, heads_per_block=None, out_dtype=None):
    B, L, D = q.shape
    H, hd = num_heads, head_dim
    assert D == H * hd
    assert L % window == 0
    assert window % 8 == 0 or window == L, \
        "attention_window must be a multiple of 8 (sublane tiling)"
    n_win = L // window
    itemsize = jnp.dtype(q.dtype).itemsize
    if heads_per_block is None:
        heads_per_block = _choose_heads_per_block(H, hd, window, itemsize)
    hg = heads_per_block
    assert H % hg == 0
    hgd = hg * hd
    assert hgd == D or hgd % 128 == 0, \
        "heads_per_block * head_dim must be lane-aligned (multiple of 128) or D"
    n_groups = H // hg
    out_dtype = out_dtype or q.dtype

    static_alpha = float(alpha) if isinstance(alpha, (int, float)) else None
    kernel = functools.partial(_attn_window_kernel, heads_per_block=hg,
                               head_dim=hd, n_iter=n_iter,
                               static_alpha=static_alpha)

    blk = pl.BlockSpec((None, window, hgd), lambda b, w, g: (b, w, g))
    in_specs = [blk, blk, blk]
    args = [q, k, v]
    if static_alpha is None:
        alpha_arr = jnp.asarray(alpha, jnp.float32).reshape(H)
        in_specs = [pl.BlockSpec(memory_space=pltpu.MemorySpace.SMEM)] + in_specs
        args = [alpha_arr] + args

    # Cost hint: MXU flops for QK^T + PV, plus the bisection's VPU work that
    # XLA cannot infer from the matmul shapes.
    flops = 4 * B * L * window * D + 3 * n_iter * B * L * window * H
    transcendentals = 0 if static_alpha is not None else 2 * n_iter * B * L * window * H
    bytes_accessed = 4 * B * L * D * itemsize

    return pl.pallas_call(
        kernel,
        grid=(B, n_win, n_groups),
        in_specs=in_specs,
        out_specs=pl.BlockSpec((None, window, hgd), lambda b, w, g: (b, w, g)),
        out_shape=jax.ShapeDtypeStruct((B, L, D), out_dtype),
        compiler_params=pltpu.CompilerParams(
            dimension_semantics=("parallel", "parallel", "parallel"),
            vmem_limit_bytes=_VMEM_LIMIT_BYTES),
        cost_estimate=pl.CostEstimate(flops=flops,
                                      transcendentals=transcendentals,
                                      bytes_accessed=bytes_accessed),
    )(*args)


def _ln_linear(x, gamma, beta, w, bias, eps=1e-5, tile_m=512, tile_n=512):
    """LayerNorm(x) @ w + bias, fused.  Full-N tile whenever the weight fits
    (LayerNorm computed once per row tile; lane-dense output)."""
    M, D = x.shape
    _, N = w.shape
    itemsize = jnp.dtype(w.dtype).itemsize
    tm = min(tile_m, M)
    tn = N if (D * N * itemsize <= 16 * 1024 * 1024 or N <= tile_n) else tile_n
    # TODO(synk): when tn < N the LayerNorm statistics are recomputed per
    # N-tile; only happens for very large (D, N) weights.
    kernel = functools.partial(_ln_linear_kernel, eps=eps)
    return pl.pallas_call(
        kernel,
        grid=(pl.cdiv(M, tm), pl.cdiv(N, tn)),
        in_specs=[pl.BlockSpec((tm, D), lambda i, j: (i, 0)),
                  pl.BlockSpec((1, D), lambda i, j: (0, 0)),
                  pl.BlockSpec((1, D), lambda i, j: (0, 0)),
                  pl.BlockSpec((D, tn), lambda i, j: (0, j)),
                  pl.BlockSpec((1, tn), lambda i, j: (0, j))],
        out_specs=pl.BlockSpec((tm, tn), lambda i, j: (i, j)),
        out_shape=jax.ShapeDtypeStruct((M, N), jnp.float32),
        compiler_params=pltpu.CompilerParams(
            dimension_semantics=("parallel", "parallel"),
            vmem_limit_bytes=_VMEM_LIMIT_BYTES),
    )(x, gamma.reshape(1, D), beta.reshape(1, D), w, bias.reshape(1, N))


# ---------------------------------------------------------------------------
# FlashAttention forward
# ---------------------------------------------------------------------------
def flash_attention_forward(x, params, num_heads, attention_window, alpha=1.5,
                            n_iter=30, storage_dtype=jnp.bfloat16,
                            heads_per_block=None):
    """x: [B, L, D] float32; alpha: python float > 1 or array of shape [num_heads].

    storage_dtype: dtype of activations/weights fed to the MXU kernels.
    bfloat16 (default) halves HBM/VMEM traffic and uses the MXU at native rate;
    matmul accumulation, entmax and LayerNorm stay in float32 either way.
    Use jnp.float32 for PyTorch-parity numerics.
    """
    B, L, D = x.shape
    H = num_heads
    hd = D // H
    W = attention_window
    assert D % H == 0, "embed_dim must be divisible by num_heads"
    assert L % W == 0  # TODO(synk): ragged final window (L % W != 0) not supported
    # TODO(synk): AdaptiveSpan.trim_memory / span masking not translated (span=None path).
    if alpha is None:
        alpha = 1.5  # entmax library default

    sd = storage_dtype
    x2 = x.reshape(B * L, D).astype(sd)

    # qkv projection -> three separate lane-dense (B*L, D) arrays.
    q, k, v = _qkv_proj(x2,
                        params["w_q"].astype(sd), params["w_k"].astype(sd),
                        params["w_v"].astype(sd),
                        params["b_q"], params["b_k"], params["b_v"],
                        out_dtype=sd)
    q = q.reshape(B, L, D)                       # free (contiguous) reshapes
    k = k.reshape(B, L, D)
    v = v.reshape(B, L, D)

    out = _window_attention(q, k, v, alpha, H, hd, W, n_iter=n_iter,
                            heads_per_block=heads_per_block, out_dtype=sd)
    out2 = out.reshape(B * L, D)                 # free (contiguous) reshape

    y = _ln_linear(out2, params["ln_gamma"], params["ln_beta"],
                   params["w_o"].astype(sd), params["b_o"])
    return y.reshape(B, L, D)


def init_params(key, embed_dim):
    D = embed_dim
    ks = jax.random.split(key, 8)
    scale = 1.0 / (D ** 0.5)
    return {
        # stored as (in, out): y = x @ W + b   (== PyTorch x @ weight.T + bias),
        # with head-major columns (head h = columns h*hd:(h+1)*hd).
        "w_q": jax.random.normal(ks[0], (D, D), jnp.float32) * scale,
        "w_k": jax.random.normal(ks[1], (D, D), jnp.float32) * scale,
        "w_v": jax.random.normal(ks[2], (D, D), jnp.float32) * scale,
        "b_q": jax.random.normal(ks[3], (D,), jnp.float32) * 0.01,
        "b_k": jax.random.normal(ks[4], (D,), jnp.float32) * 0.01,
        "b_v": jax.random.normal(ks[5], (D,), jnp.float32) * 0.01,
        "w_o": jax.random.normal(ks[6], (D, D), jnp.float32) * scale,
        "b_o": jax.random.normal(ks[7], (D,), jnp.float32) * 0.01,
        "ln_gamma": jnp.ones((D,), jnp.float32),
        "ln_beta": jnp.zeros((D,), jnp.float32),
    }


# ---------------------------------------------------------------------------
# Pure-JAX reference (same entmax bisection), for correctness checking.
# ---------------------------------------------------------------------------
def _reference_forward(x, params, num_heads, window, alpha, n_iter=30):
    B, L, D = x.shape
    H = num_heads
    hd = D // H
    xf = x.reshape(B * L, D)
    q = xf @ params["w_q"] + params["b_q"]
    k = xf @ params["w_k"] + params["b_k"]
    v = xf @ params["w_v"] + params["b_v"]

    def heads(t):  # (B*L, D) -> (B, H, L, hd)
        return t.reshape(B, L, H, hd).transpose(0, 2, 1, 3)

    q, k, v = heads(q), heads(k), heads(v)
    n_win = L // window
    qw = q.reshape(B, H, n_win, window, hd)
    kw = k.reshape(B, H, n_win, window, hd)
    vw = v.reshape(B, H, n_win, window, hd)
    scores = jnp.einsum("bhwqd,bhwkd->bhwqk", qw, kw) / (hd ** 0.5)
    if isinstance(alpha, (int, float)):
        a = alpha
    else:
        a = jnp.asarray(alpha, jnp.float32).reshape(1, H, 1, 1, 1)
    weights = _entmax_bisect(scores, a, n_iter=n_iter)
    out = jnp.einsum("bhwqk,bhwkd->bhwqd", weights, vw)
    out = out.reshape(B, H, L, hd).transpose(0, 2, 1, 3).reshape(B, L, D)
    mean = out.mean(-1, keepdims=True)
    var = ((out - mean) ** 2).mean(-1, keepdims=True)
    xn = (out - mean) / jnp.sqrt(var + 1e-5)
    y = xn * params["ln_gamma"] + params["ln_beta"]
    return y @ params["w_o"] + params["b_o"]


if __name__ == "__main__":
    B, L, D = 2, 16, 32
    num_heads = 4
    attention_window = 8

    key = jax.random.PRNGKey(0)
    kx, kp = jax.random.split(key)
    x = jax.random.normal(kx, (B, L, D), jnp.float32)
    params = init_params(kp, D)

    # 1) Default path: bf16 storage, static alpha=1.5 (relu(z)**2 fast path).
    y = flash_attention_forward(x, params, num_heads, attention_window, alpha=1.5)
    y = jax.block_until_ready(y)
    assert y.shape == (B, L, D)
    assert bool(jnp.all(jnp.isfinite(y)))

    # 2) float32 storage: compare against the pure-JAX reference.
    y32 = flash_attention_forward(x, params, num_heads, attention_window,
                                  alpha=1.5, storage_dtype=jnp.float32)
    y32 = jax.block_until_ready(y32)
    y_ref = jax.block_until_ready(
        _reference_forward(x, params, num_heads, attention_window, alpha=1.5))
    assert bool(jnp.allclose(y32, y_ref, rtol=5e-2, atol=5e-2)), \
        "kernel output deviates from the pure-JAX reference"

    # 3) Per-head (tensor) alpha: general exp/log entmax path, alpha from SMEM.
    alpha_vec = jnp.array([1.5, 1.5, 2.0, 1.25], jnp.float32)
    y2 = flash_attention_forward(x, params, num_heads, attention_window,
                                 alpha=alpha_vec)
    y2 = jax.block_until_ready(y2)
    assert y2.shape == (B, L, D)
    assert bool(jnp.all(jnp.isfinite(y2)))

    print("KERNEL_OK")
</pallas_src>

<mosaic_0001>
module attributes {stable_mosaic.version = 11 : i64} {
  func.func @_qkv_proj_kernel(%arg0: i32, %arg1: i32, %arg2: memref<32x32xbf16, #tpu.memory_space<vmem>>, %arg3: memref<32x32xbf16, #tpu.memory_space<vmem>>, %arg4: memref<32x32xbf16, #tpu.memory_space<vmem>>, %arg5: memref<32x32xbf16, #tpu.memory_space<vmem>>, %arg6: memref<1x32xf32, #tpu.memory_space<vmem>>, %arg7: memref<1x32xf32, #tpu.memory_space<vmem>>, %arg8: memref<1x32xf32, #tpu.memory_space<vmem>>, %arg9: memref<32x32xbf16, #tpu.memory_space<vmem>>, %arg10: memref<32x32xbf16, #tpu.memory_space<vmem>>, %arg11: memref<32x32xbf16, #tpu.memory_space<vmem>>) attributes {dimension_semantics = [#tpu.dimension_semantics<parallel>, #tpu.dimension_semantics<parallel>], iteration_bounds = array<i64: 1, 1>, scalar_prefetch = 0 : i64, scratch_operands = 0 : i64, tpu.core_type = #tpu.core_type<tc>, window_params = [{transform_indices = @transform_0, window_bounds = array<i64: 32, 32>}, {transform_indices = @transform_1, window_bounds = array<i64: 32, 32>}, {transform_indices = @transform_2, window_bounds = array<i64: 32, 32>}, {transform_indices = @transform_3, window_bounds = array<i64: 32, 32>}, {transform_indices = @transform_4, window_bounds = array<i64: 1, 32>}, {transform_indices = @transform_5, window_bounds = array<i64: 1, 32>}, {transform_indices = @transform_6, window_bounds = array<i64: 1, 32>}, {transform_indices = @transform_7, window_bounds = array<i64: 32, 32>}, {transform_indices = @transform_8, window_bounds = array<i64: 32, 32>}, {transform_indices = @transform_9, window_bounds = array<i64: 32, 32>}]} {
    %c0 = arith.constant 0 : index
    %c0_0 = arith.constant 0 : index
    %0 = vector.load %arg2[%c0, %c0_0] : memref<32x32xbf16, #tpu.memory_space<vmem>>, vector<32x32xbf16>
    %c0_1 = arith.constant 0 : index
    %c0_2 = arith.constant 0 : index
    %1 = vector.load %arg3[%c0_1, %c0_2] : memref<32x32xbf16, #tpu.memory_space<vmem>>, vector<32x32xbf16>
    %cst = arith.constant dense<0.000000e+00> : vector<32x32xf32>
    %2 = tpu.matmul %0, %1, %cst {dimension_numbers = #tpu.dot_dimension_numbers<[1], [0], [0], [1], [0, 0, 1, 1], [], []>} : vector<32x32xbf16>, vector<32x32xbf16>, vector<32x32xf32> -> vector<32x32xf32>
    %c0_3 = arith.constant 0 : index
    %c0_4 = arith.constant 0 : index
    %3 = vector.load %arg6[%c0_3, %c0_4] : memref<1x32xf32, #tpu.memory_space<vmem>>, vector<1x32xf32>
    %4 = vector.broadcast %3 : vector<1x32xf32> to vector<32x32xf32>
    %5 = arith.addf %2, %4 : vector<32x32xf32>
    %6 = arith.truncf %5 : vector<32x32xf32> to vector<32x32xbf16>
    %c0_5 = arith.constant 0 : index
    %c0_6 = arith.constant 0 : index
    %7 = vector.load %arg9[%c0_5, %c0_6] : memref<32x32xbf16, #tpu.memory_space<vmem>>, vector<32x32xbf16>
    tpu.vector_store %arg9[%c0_5, %c0_6], %6 {strides = array<i32>} : memref<32x32xbf16, #tpu.memory_space<vmem>>, vector<32x32xbf16>,
    %c0_7 = arith.constant 0 : index
    %c0_8 = arith.constant 0 : index
    %8 = vector.load %arg4[%c0_7, %c0_8] : memref<32x32xbf16, #tpu.memory_space<vmem>>, vector<32x32xbf16>
    %cst_9 = arith.constant dense<0.000000e+00> : vector<32x32xf32>
    %9 = tpu.matmul %0, %8, %cst_9 {dimension_numbers = #tpu.dot_dimension_numbers<[1], [0], [0], [1], [0, 0, 1, 1], [], []>} : vector<32x32xbf16>, vector<32x32xbf16>, vector<32x32xf32> -> vector<32x32xf32>
    %c0_10 = arith.constant 0 : index
    %c0_11 = arith.constant 0 : index
    %10 = vector.load %arg7[%c0_10, %c0_11] : memref<1x32xf32, #tpu.memory_space<vmem>>, vector<1x32xf32>
    %11 = vector.broadcast %10 : vector<1x32xf32> to vector<32x32xf32>
    %12 = arith.addf %9, %11 : vector<32x32xf32>
    %13 = arith.truncf %12 : vector<32x32xf32> to vector<32x32xbf16>
    %c0_12 = arith.constant 0 : index
    %c0_13 = arith.constant 0 : index
    %14 = vector.load %arg10[%c0_12, %c0_13] : memref<32x32xbf16, #tpu.memory_space<vmem>>, vector<32x32xbf16>
    tpu.vector_store %arg10[%c0_12, %c0_13], %13 {strides = array<i32>} : memref<32x32xbf16, #tpu.memory_space<vmem>>, vector<32x32xbf16>,
    %c0_14 = arith.constant 0 : index
    %c0_15 = arith.constant 0 : index
    %15 = vector.load %arg5[%c0_14, %c0_15] : memref<32x32xbf16, #tpu.memory_space<vmem>>, vector<32x32xbf16>
    %cst_16 = arith.constant dense<0.000000e+00> : vector<32x32xf32>
    %16 = tpu.matmul %0, %15, %cst_16 {dimension_numbers = #tpu.dot_dimension_numbers<[1], [0], [0], [1], [0, 0, 1, 1], [], []>} : vector<32x32xbf16>, vector<32x32xbf16>, vector<32x32xf32> -> vector<32x32xf32>
    %c0_17 = arith.constant 0 : index
    %c0_18 = arith.constant 0 : index
    %17 = vector.load %arg8[%c0_17, %c0_18] : memref<1x32xf32, #tpu.memory_space<vmem>>, vector<1x32xf32>
    %18 = vector.broadcast %17 : vector<1x32xf32> to vector<32x32xf32>
    %19 = arith.addf %16, %18 : vector<32x32xf32>
    %20 = arith.truncf %19 : vector<32x32xf32> to vector<32x32xbf16>
    %c0_19 = arith.constant 0 : index
    %c0_20 = arith.constant 0 : index
    %21 = vector.load %arg11[%c0_19, %c0_20] : memref<32x32xbf16, #tpu.memory_space<vmem>>, vector<32x32xbf16>
    tpu.vector_store %arg11[%c0_19, %c0_20], %20 {strides = array<i32>} : memref<32x32xbf16, #tpu.memory_space<vmem>>, vector<32x32xbf16>,
    return
  }
  func.func @transform_0(%arg0: i32, %arg1: i32) -> (i32, i32) {
    %c0_i32 = arith.constant 0 : i32
    %c0_i32_0 = arith.constant 0 : i32
    return %arg0, %c0_i32 : i32, i32
  }
  func.func @transform_1(%arg0: i32, %arg1: i32) -> (i32, i32) {
    %c0_i32 = arith.constant 0 : i32
    %c0_i32_0 = arith.constant 0 : i32
    return %c0_i32, %arg1 : i32, i32
  }
  func.func @transform_2(%arg0: i32, %arg1: i32) -> (i32, i32) {
    %c0_i32 = arith.constant 0 : i32
    %c0_i32_0 = arith.constant 0 : i32
    return %c0_i32, %arg1 : i32, i32
  }
  func.func @transform_3(%arg0: i32, %arg1: i32) -> (i32, i32) {
    %c0_i32 = arith.constant 0 : i32
    %c0_i32_0 = arith.constant 0 : i32
    return %c0_i32, %arg1 : i32, i32
  }
  func.func @transform_4(%arg0: i32, %arg1: i32) -> (i32, i32) {
    %c0_i32 = arith.constant 0 : i32
    %c0_i32_0 = arith.constant 0 : i32
    return %c0_i32, %arg1 : i32, i32
  }
  func.func @transform_5(%arg0: i32, %arg1: i32) -> (i32, i32) {
    %c0_i32 = arith.constant 0 : i32
    %c0_i32_0 = arith.constant 0 : i32
    return %c0_i32, %arg1 : i32, i32
  }
  func.func @transform_6(%arg0: i32, %arg1: i32) -> (i32, i32) {
    %c0_i32 = arith.constant 0 : i32
    %c0_i32_0 = arith.constant 0 : i32
    return %c0_i32, %arg1 : i32, i32
  }
  func.func @transform_7(%arg0: i32, %arg1: i32) -> (i32, i32) {
    %c0_i32 = arith.constant 0 : i32
    return %arg0, %arg1 : i32, i32
  }
  func.func @transform_8(%arg0: i32, %arg1: i32) -> (i32, i32) {
    %c0_i32 = arith.constant 0 : i32
    return %arg0, %arg1 : i32, i32
  }
  func.func @transform_9(%arg0: i32, %arg1: i32) -> (i32, i32) {
    %c0_i32 = arith.constant 0 : i32
    return %arg0, %arg1 : i32, i32
  }
}

</mosaic_0001>

<llo_original>
// kernel: tpu_custom_call.1
$region0: #{tpu_custom_call.1}
  #allocation0 [shape = 'u32[]', space=smem, size = 0x4, offset = 0x4, fixed_abs, tag = 'smem constant byte address 0x4 - core index']
  #allocation1 [shape = 'u32[144,128]{1,0:T(1,128)}', space=vmem, size = 0x12000, scoped, tag = 'internal scratch']
  %s0 = inlined_call_operand.hbm [shape: bf16[32,32], index: 0, kind: input, shape index: {}]
  %s1 = inlined_call_operand.hbm [shape: bf16[32,32], index: 1, kind: input, shape index: {}]
  %s2 = inlined_call_operand.hbm [shape: bf16[32,32], index: 2, kind: input, shape index: {}]
  %s3 = inlined_call_operand.hbm [shape: bf16[32,32], index: 3, kind: input, shape index: {}]
  %s4 = inlined_call_operand.hbm [shape: f32[1,32], index: 4, kind: input, shape index: {}]
  %s5 = inlined_call_operand.hbm [shape: f32[1,32], index: 5, kind: input, shape index: {}]
  %s6 = inlined_call_operand.hbm [shape: f32[1,32], index: 6, kind: input, shape index: {}]
  %s7 = inlined_call_operand.hbm [shape: bf16[32,32], index: 7, kind: output, shape index: {0}]
  %s8 = inlined_call_operand.hbm [shape: bf16[32,32], index: 8, kind: output, shape index: {1}]
  %s9 = inlined_call_operand.hbm [shape: bf16[32,32], index: 9, kind: output, shape index: {2}]
  %10 = xla_tuple %s7, %s8, %s9
  %s11 = sld [smem:[#allocation0]]
  $region82: #{tpu_custom_call.1} parent=0
    _
  %s13 = ssub.s32 1, %s11
  %s14 = scalar_select 0, %s13, %s11
  $region1: #{tpu_custom_call.1} parent=0
    #allocation2 [shape = 'u8[8192]{0}', space=vmem, size = 0x2000, scoped, tag = 'input window, operand 0, single buffered']
    #allocation3 [shape = 's32[1]{0}', space=sflag, size = 0x4, scoped, tag = 'scoped memory for tpu_custom_call.1']
    #allocation4 [shape = 's32[1]{0}', space=sflag, size = 0x4, scoped, tag = 'scoped memory for tpu_custom_call.1']
    #allocation5 [shape = 'u8[8192]{0}', space=vmem, size = 0x2000, scoped, tag = 'input window, operand 1, single buffered']
    #allocation6 [shape = 's32[1]{0}', space=sflag, size = 0x4, scoped, tag = 'scoped memory for tpu_custom_call.1']
    #allocation7 [shape = 'u8[8192]{0}', space=vmem, size = 0x2000, scoped, tag = 'input window, operand 2, single buffered']
    #allocation8 [shape = 'u8[8192]{0}', space=vmem, size = 0x2000, scoped, tag = 'input window, operand 3, single buffered']
    #allocation9 [shape = 's32[1]{0}', space=sflag, size = 0x4, scoped, tag = 'scoped memory for tpu_custom_call.1']
    #allocation10 [shape = 'u8[512]{0}', space=vmem, size = 0x400, scoped, tag = 'input window, operand 4, single buffered']
    #allocation11 [shape = 'u8[512]{0}', space=vmem, size = 0x400, scoped, tag = 'input window, operand 5, single buffered']
    #allocation12 [shape = 's32[1]{0}', space=sflag, size = 0x4, scoped, tag = 'scoped memory for tpu_custom_call.1']
    #allocation13 [shape = 'u8[512]{0}', space=vmem, size = 0x400, scoped, tag = 'input window, operand 6, single buffered']
    #allocation14 [shape = 'u8[8192]{0}', space=vmem, size = 0x2000, scoped, tag = 'output window, operand 0, single buffered']
    #allocation15 [shape = 'u8[8192]{0}', space=vmem, size = 0x2000, scoped, tag = 'output window, operand 1, single buffered']
    #allocation16 [shape = 's32[1]{0}', space=sflag, size = 0x4, scoped, tag = 'scoped memory for tpu_custom_call.1']
    #allocation17 [shape = 'u8[8192]{0}', space=vmem, size = 0x2000, scoped, tag = 'output window, operand 2, single buffered']
    %15 = vsyncpa [#allocation3], 0
    %16 = vsyncpa [#allocation6], 0
    %17 = vsyncpa [#allocation9], 0
    %18 = vsyncpa [#allocation12], 0
    %19 = vsyncpa [#allocation4], 0
    %20 = vsyncpa [#allocation16], 0
    // Predicated region
    $region2: #{tpu_custom_call.1} parent=1 // pred_check
      _
    $region3: #{tpu_custom_call.1} parent=1 // pred_check_branch
      %22 = sbr.rel (0) target = $region5
    $region4: #{tpu_custom_call.1} parent=1 // pred_region
      %s24 = ssub.s32 256, 256
      %25 = vsyncadd [#allocation3], %s24
      %s26 = sshll.u32 [#allocation2], 4
      %s27 = int_to_ptr.vmem [resolvable:$true] %s26
      %32 = dma.hbm_to_vmem [thread:$0]  %s0, 256, %s27, [#allocation3], 64, 64, 4
    $region5: #{tpu_custom_call.1} parent=1 // pred_fallthru
      _
    // Predicated region
    $region6: #{tpu_custom_call.1} parent=1 // pred_check
      _
    $region7: #{tpu_custom_call.1} parent=1 // pred_check_branch
      %34 = sbr.rel (0) target = $region9
    $region8: #{tpu_custom_call.1} parent=1 // pred_region
      %s36 = ssub.s32 256, 256
      %37 = vsyncadd [#allocation6], %s36
      %s38 = sshll.u32 [#allocation5], 4
      %s39 = int_to_ptr.vmem [resolvable:$true] %s38
      %44 = dma.hbm_to_vmem [thread:$0]  %s1, 256, %s39, [#allocation6], 64, 64, 4
    $region9: #{tpu_custom_call.1} parent=1 // pred_fallthru
      _
    // Predicated region
    $region10: #{tpu_custom_call.1} parent=1 // pred_check
      _
    $region11: #{tpu_custom_call.1} parent=1 // pred_check_branch
      %46 = sbr.rel (0) target = $region13
    $region12: #{tpu_custom_call.1} parent=1 // pred_region
      %s48 = ssub.s32 256, 256
      %49 = vsyncadd [#allocation6], %s48
      %s50 = sshll.u32 [#allocation7], 4
      %s51 = int_to_ptr.vmem [resolvable:$true] %s50
      %56 = dma.hbm_to_vmem [thread:$0]  %s2, 256, %s51, [#allocation6], 64, 64, 4
    $region13: #{tpu_custom_call.1} parent=1 // pred_fallthru
      _
    // Predicated region
    $region14: #{tpu_custom_call.1} parent=1 // pred_check
      _
    $region15: #{tpu_custom_call.1} parent=1 // pred_check_branch
      %58 = sbr.rel (0) target = $region17
    $region16: #{tpu_custom_call.1} parent=1 // pred_region
      %s60 = ssub.s32 256, 256
      %61 = vsyncadd [#allocation9], %s60
      %s62 = sshll.u32 [#allocation8], 4
      %s63 = int_to_ptr.vmem [resolvable:$true] %s62
      %68 = dma.hbm_to_vmem [thread:$0]  %s3, 256, %s63, [#allocation9], 64, 64, 4
    $region17: #{tpu_custom_call.1} parent=1 // pred_fallthru
      _
    // Predicated region
    $region18: #{tpu_custom_call.1} parent=1 // pred_check
      _
    $region19: #{tpu_custom_call.1} parent=1 // pred_check_branch
      %70 = sbr.rel (0) target = $region21
    $region20: #{tpu_custom_call.1} parent=1 // pred_region
      %s72 = ssub.s32 16, 16
      %73 = vsyncadd [#allocation9], %s72
      %s75 = sshll.u32 [#allocation10], 4
      %s76 = int_to_ptr.vmem [resolvable:$true] %s75
      %78 = dma.hbm_to_vmem [thread:$0]  %s4, 16, %s76, [#allocation9]
    $region21: #{tpu_custom_call.1} parent=1 // pred_fallthru
      _
    // Predicated region
    $region22: #{tpu_custom_call.1} parent=1 // pred_check
      _
    $region23: #{tpu_custom_call.1} parent=1 // pred_check_branch
      %80 = sbr.rel (0) target = $region25
    $region24: #{tpu_custom_call.1} parent=1 // pred_region
      %s82 = ssub.s32 16, 16
      %83 = vsyncadd [#allocation12], %s82
      %s85 = sshll.u32 [#allocation11], 4
      %s86 = int_to_ptr.vmem [resolvable:$true] %s85
      %88 = dma.hbm_to_vmem [thread:$0]  %s5, 16, %s86, [#allocation12]
    $region25: #{tpu_custom_call.1} parent=1 // pred_fallthru
      _
    // Predicated region
    $region26: #{tpu_custom_call.1} parent=1 // pred_check
      _
    $region27: #{tpu_custom_call.1} parent=1 // pred_check_branch
      %90 = sbr.rel (0) target = $region29
    $region28: #{tpu_custom_call.1} parent=1 // pred_region
      %s92 = ssub.s32 16, 16
      %93 = vsyncadd [#allocation12], %s92
      %s95 = sshll.u32 [#allocation13], 4
      %s96 = int_to_ptr.vmem [resolvable:$true] %s95
      %98 = dma.hbm_to_vmem [thread:$0]  %s6, 16, %s96, [#allocation12]
    $region29: #{tpu_custom_call.1} parent=1 // pred_fallthru
      _
    // Predicated region
    $region30: #{tpu_custom_call.1} parent=1 // pred_check
      _
    $region31: #{tpu_custom_call.1} parent=1 // pred_check_branch
      %100 = sbr.rel (0) target = $region33
    $region32: #{tpu_custom_call.1} parent=1 // pred_region
      %101 = dma.done [#allocation3], 256
    $region33: #{tpu_custom_call.1} parent=1 // pred_fallthru
      _
    // Predicated region
    $region34: #{tpu_custom_call.1} parent=1 // pred_check
      _
    $region35: #{tpu_custom_call.1} parent=1 // pred_check_branch
      %103 = sbr.rel (0) target = $region37
    $region36: #{tpu_custom_call.1} parent=1 // pred_region
      %104 = dma.done [#allocation6], 256
    $region37: #{tpu_custom_call.1} parent=1 // pred_fallthru
      _
    // Predicated region
    $region38: #{tpu_custom_call.1} parent=1 // pred_check
      _
    $region39: #{tpu_custom_call.1} parent=1 // pred_check_branch
      %106 = sbr.rel (0) target = $region41
    $region40: #{tpu_custom_call.1} parent=1 // pred_region
      %107 = dma.done [#allocation6], 256
    $region41: #{tpu_custom_call.1} parent=1 // pred_fallthru
      _
    // Predicated region
    $region42: #{tpu_custom_call.1} parent=1 // pred_check
      _
    $region43: #{tpu_custom_call.1} parent=1 // pred_check_branch
      %109 = sbr.rel (0) target = $region45
    $region44: #{tpu_custom_call.1} parent=1 // pred_region
      %110 = dma.done [#allocation9], 256
    $region45: #{tpu_custom_call.1} parent=1 // pred_fallthru
      _
    // Predicated region
    $region46: #{tpu_custom_call.1} parent=1 // pred_check
      _
    $region47: #{tpu_custom_call.1} parent=1 // pred_check_branch
      %112 = sbr.rel (0) target = $region49
    $region48: #{tpu_custom_call.1} parent=1 // pred_region
      %113 = dma.done [#allocation9], 16
    $region49: #{tpu_custom_call.1} parent=1 // pred_fallthru
      _
    // Predicated region
    $region50: #{tpu_custom_call.1} parent=1 // pred_check
      _
    $region51: #{tpu_custom_call.1} parent=1 // pred_check_branch
      %115 = sbr.rel (0) target = $region53
    $region52: #{tpu_custom_call.1} parent=1 // pred_region
      %116 = dma.done [#allocation12], 16
    $region53: #{tpu_custom_call.1} parent=1 // pred_fallthru
      _
    // Predicated region
    $region54: #{tpu_custom_call.1} parent=1 // pred_check
      _
    $region55: #{tpu_custom_call.1} parent=1 // pred_check_branch
      %118 = sbr.rel (0) target = $region57
    $region56: #{tpu_custom_call.1} parent=1 // pred_region
      %119 = dma.done [#allocation12], 16
    $region57: #{tpu_custom_call.1} parent=1 // pred_fallthru
      _
    %v121 = vld [vmem:[#allocation2] sm:$0xf]
    %v122 = vld [vmem:[#allocation2 + $0x4] sm:$0xf]
    %v123 = vld [vmem:[#allocation2 + $0x8] sm:$0xf]
    %v124 = vld [vmem:[#allocation2 + $0xc] sm:$0xf]
    %v125 = vld [vmem:[#allocation5] sm:$0xf]
    %v126 = vld [vmem:[#allocation5 + $0x4] sm:$0xf]
    %v127 = vld [vmem:[#allocation5 + $0x8] sm:$0xf]
    %v128 = vld [vmem:[#allocation5 + $0xc] sm:$0xf]
    %v129 = vld [vmem:[#allocation10] sm:$0x1]
    %v131 = vlaneseq
    %v132 = vshrl.u32 %v131, 7
    %v133 = vsub.s32 0, %v132
    %v134 = vrot.slane %v129, %v133
    %v140 = vunpack.c.l.b16 %v121
    %v141 = vunpack.c.l.b16 %v122
    %v142 = vunpack.c.l.b16 %v123
    %v143 = vunpack.c.l.b16 %v124
    %v144 = vpack.c.b16 %v141, %v140
    %v145 = vpack.c.b16 %v143, %v142
    %v150 = vunpack.c.l.b16 %v125
    %v151 = vunpack.c.l.b16 %v126
    %v152 = vunpack.c.l.b16 %v127
    %v153 = vunpack.c.l.b16 %v128
    %v154 = vpack.c.b16 %v151, %v150
    %v155 = vpack.c.b16 %v153, %v152
    %vm158 = vcmask 261120
    %v160 = vsel %vm158, %v144, 0
    %v163 = vsel %vm158, %v145, 0
    %165 = vmatprep.subr.bf16.mxu0 0
    %166 = vmatpush1.bf16.msra.mxu0 %v154
    %167 = vmatprep.subr.bf16.mxu0 0
    %168 = vmatpush1.bf16.msra.mxu0 %v155
    %169 = vmatprep.subr.bf16.mxu0 0
    %170 = vmatpush1.bf16.msra.mxu0 0
    %171 = vmatprep.subr.bf16.mxu0 0
    %172 = vmatpush1.bf16.msra.mxu0 0
    %173 = vmatprep.subr.bf16.mxu0 0
    %174 = vmatpush1.bf16.msra.mxu0 0
    %175 = vmatprep.subr.bf16.mxu0 0
    %176 = vmatpush1.bf16.msra.mxu0 0
    %177 = vmatprep.subr.bf16.mxu0 0
    %178 = vmatpush1.bf16.msra.mxu0 0
    %179 = vmatprep.subr.bf16.mxu0 0
    %180 = vmatpush1.bf16.msra.mxu0 0
    %181 = vmatprep.subr.bf16.mxu0 0
    %182 = vmatpush1.bf16.msra.mxu0 0
    %183 = vmatprep.subr.bf16.mxu0 0
    %184 = vmatpush1.bf16.msra.mxu0 0
    %185 = vmatprep.subr.bf16.mxu0 0
    %186 = vmatpush1.bf16.msra.mxu0 0
    %187 = vmatprep.subr.bf16.mxu0 0
    %188 = vmatpush1.bf16.msra.mxu0 0
    %189 = vmatprep.subr.bf16.mxu0 0
    %190 = vmatpush1.bf16.msra.mxu0 0
    %191 = vmatprep.subr.bf16.mxu0 0
    %192 = vmatpush1.bf16.msra.mxu0 0
    %193 = vmatprep.subr.bf16.mxu0 0
    %194 = vmatpush1.bf16.msra.mxu0 0
    %195 = vmatprep.subr.bf16.mxu0 0
    %196 = vmatpush1.bf16.msra.mxu0 0
    %197 = vmatprep.mubr.bf16.mxu0 0
    %198 = vmatmul.mubr.bf16.gmra.mrb[0].mxu0 %v160
    %v199 = vpop.f32.mrb[0].mxu0
    %v200 = vadd.f32 %v134, %v199
    %v201 = vpop.f32.mrb[0].mxu0
    %v202 = vpop.f32.mrb[0].mxu0
    %v203 = vadd.f32 %v134, %v202
    %v204 = vpop.f32.mrb[0].mxu0
    %205 = vmatprep.mubr.bf16.mxu0 0
    %206 = vmatmul.mubr.bf16.gmra.mrb[0].mxu0 %v163
    %v207 = vpop.f32.mrb[0].mxu0
    %v208 = vadd.f32 %v134, %v207
    %v209 = vpop.f32.mrb[0].mxu0
    %v210 = vpop.f32.mrb[0].mxu0
    %v211 = vadd.f32 %v134, %v210
    %v212 = vpop.f32.mrb[0].mxu0
    %213 = vdwg.mxu0
    %v214 = vpack.c.bf16 %v203, %v200
    %v215 = vpack.c.bf16 %v211, %v208
    %v218 = vunpack.c.l.b16 %v214
    %v219 = vunpack.c.h.b16 %v214
    %v220 = vunpack.c.l.b16 %v215
    %v221 = vunpack.c.h.b16 %v215
    %v222 = vpack.c.b16 %v218, %v218
    %v223 = vpack.c.b16 %v219, %v219
    %v224 = vpack.c.b16 %v220, %v220
    %v225 = vpack.c.b16 %v221, %v221
    %vm230 = vcmask 257024
    %231 = vst.msk [vmem:[#allocation14] sm:$0xf] %vm230, %v222
    %232 = vst.msk [vmem:[#allocation14 + $0x4] sm:$0xf] %vm230, %v223
    %233 = vst.msk [vmem:[#allocation14 + $0x8] sm:$0xf] %vm230, %v224
    %234 = vst.msk [vmem:[#allocation14 + $0xc] sm:$0xf] %vm230, %v225
    %v235 = vld [vmem:[#allocation7] sm:$0xf]
    %v236 = vld [vmem:[#allocation7 + $0x4] sm:$0xf]
    %v237 = vld [vmem:[#allocation7 + $0x8] sm:$0xf]
    %v238 = vld [vmem:[#allocation7 + $0xc] sm:$0xf]
    %v239 = vld [vmem:[#allocation11] sm:$0x1]
    %v241 = vlaneseq
    %v242 = vshrl.u32 %v241, 7
    %v243 = vsub.s32 0, %v242
    %v244 = vrot.slane %v239, %v243
    %v250 = vunpack.c.l.b16 %v235
    %v251 = vunpack.c.l.b16 %v236
    %v252 = vunpack.c.l.b16 %v237
    %v253 = vunpack.c.l.b16 %v238
    %v254 = vpack.c.b16 %v251, %v250
    %v255 = vpack.c.b16 %v253, %v252
    %258 = vmatprep.subr.bf16.mxu0 0
    %259 = vmatpush1.bf16.msra.mxu0 %v254
    %260 = vmatprep.subr.bf16.mxu0 0
    %261 = vmatpush1.bf16.msra.mxu0 %v255
    %262 = vmatprep.subr.bf16.mxu0 0
    %263 = vmatpush1.bf16.msra.mxu0 0
    %264 = vmatprep.subr.bf16.mxu0 0
    %265 = vmatpush1.bf16.msra.mxu0 0
    %266 = vmatprep.subr.bf16.mxu0 0
    %267 = vmatpush1.bf16.msra.mxu0 0
    %268 = vmatprep.subr.bf16.mxu0 0
    %269 = vmatpush1.bf16.msra.mxu0 0
    %270 = vmatprep.subr.bf16.mxu0 0
    %271 = vmatpush1.bf16.msra.mxu0 0
    %272 = vmatprep.subr.bf16.mxu0 0
    %273 = vmatpush1.bf16.msra.mxu0 0
    %274 = vmatprep.subr.bf16.mxu0 0
    %275 = vmatpush1.bf16.msra.mxu0 0
    %276 = vmatprep.subr.bf16.mxu0 0
    %277 = vmatpush1.bf16.msra.mxu0 0
    %278 = vmatprep.subr.bf16.mxu0 0
    %279 = vmatpush1.bf16.msra.mxu0 0
    %280 = vmatprep.subr.bf16.mxu0 0
    %281 = vmatpush1.bf16.msra.mxu0 0
    %282 = vmatprep.subr.bf16.mxu0 0
    %283 = vmatpush1.bf16.msra.mxu0 0
    %284 = vmatprep.subr.bf16.mxu0 0
    %285 = vmatpush1.bf16.msra.mxu0 0
    %286 = vmatprep.subr.bf16.mxu0 0
    %287 = vmatpush1.bf16.msra.mxu0 0
    %288 = vmatprep.subr.bf16.mxu0 0
    %289 = vmatpush1.bf16.msra.mxu0 0
    %290 = vmatprep.mubr.bf16.mxu0 0
    %291 = vmatmul.mubr.bf16.gmra.mrb[0].mxu0 %v160
    %v292 = vpop.f32.mrb[0].mxu0
    %v293 = vadd.f32 %v244, %v292
    %v294 = vpop.f32.mrb[0].mxu0
    %v295 = vpop.f32.mrb[0].mxu0
    %v296 = vadd.f32 %v244, %v295
    %v297 = vpop.f32.mrb[0].mxu0
    %298 = vmatprep.mubr.bf16.mxu0 0
    %299 = vmatmul.mubr.bf16.gmra.mrb[0].mxu0 %v163
    %v300 = vpop.f32.mrb[0].mxu0
    %v301 = vadd.f32 %v244, %v300
    %v302 = vpop.f32.mrb[0].mxu0
    %v303 = vpop.f32.mrb[0].mxu0
    %v304 = vadd.f32 %v244, %v303
    %v305 = vpop.f32.mrb[0].mxu0
    %306 = vdwg.mxu0
    %v307 = vpack.c.bf16 %v296, %v293
    %v308 = vpack.c.bf16 %v304, %v301
    %v311 = vunpack.c.l.b16 %v307
    %v312 = vunpack.c.h.b16 %v307
    %v313 = vunpack.c.l.b16 %v308
    %v314 = vunpack.c.h.b16 %v308
    %v315 = vpack.c.b16 %v311, %v311
    %v316 = vpack.c.b16 %v312, %v312
    %v317 = vpack.c.b16 %v313, %v313
    %v318 = vpack.c.b16 %v314, %v314
    %323 = vst.msk [vmem:[#allocation15] sm:$0xf] %vm230, %v315
    %324 = vst.msk [vmem:[#allocation15 + $0x4] sm:$0xf] %vm230, %v316
    %325 = vst.msk [vmem:[#allocation15 + $0x8] sm:$0xf] %vm230, %v317
    %326 = vst.msk [vmem:[#allocation15 + $0xc] sm:$0xf] %vm230, %v318
    %v327 = vld [vmem:[#allocation8] sm:$0xf]
    %v328 = vld [vmem:[#allocation8 + $0x4] sm:$0xf]
    %v329 = vld [vmem:[#allocation8 + $0x8] sm:$0xf]
    %v330 = vld [vmem:[#allocation8 + $0xc] sm:$0xf]
    %v331 = vld [vmem:[#allocation13] sm:$0x1]
    %v333 = vlaneseq
    %v334 = vshrl.u32 %v333, 7
    %v335 = vsub.s32 0, %v334
    %v336 = vrot.slane %v331, %v335
    %v342 = vunpack.c.l.b16 %v327
    %v343 = vunpack.c.l.b16 %v328
    %v344 = vunpack.c.l.b16 %v329
    %v345 = vunpack.c.l.b16 %v330
    %v346 = vpack.c.b16 %v343, %v342
    %v347 = vpack.c.b16 %v345, %v344
    %350 = vmatprep.subr.bf16.mxu0 0
    %351 = vmatpush1.bf16.msra.mxu0 %v346
    %352 = vmatprep.subr.bf16.mxu0 0
    %353 = vmatpush1.bf16.msra.mxu0 %v347
    %354 = vmatprep.subr.bf16.mxu0 0
    %355 = vmatpush1.bf16.msra.mxu0 0
    %356 = vmatprep.subr.bf16.mxu0 0
    %357 = vmatpush1.bf16.msra.mxu0 0
    %358 = vmatprep.subr.bf16.mxu0 0
    %359 = vmatpush1.bf16.msra.mxu0 0
    %360 = vmatprep.subr.bf16.mxu0 0
    %361 = vmatpush1.bf16.msra.mxu0 0
    %362 = vmatprep.subr.bf16.mxu0 0
    %363 = vmatpush1.bf16.msra.mxu0 0
    %364 = vmatprep.subr.bf16.mxu0 0
    %365 = vmatpush1.bf16.msra.mxu0 0
    %366 = vmatprep.subr.bf16.mxu0 0
    %367 = vmatpush1.bf16.msra.mxu0 0
    %368 = vmatprep.subr.bf16.mxu0 0
    %369 = vmatpush1.bf16.msra.mxu0 0
    %370 = vmatprep.subr.bf16.mxu0 0
    %371 = vmatpush1.bf16.msra.mxu0 0
    %372 = vmatprep.subr.bf16.mxu0 0
    %373 = vmatpush1.bf16.msra.mxu0 0
    %374 = vmatprep.subr.bf16.mxu0 0
    %375 = vmatpush1.bf16.msra.mxu0 0
    %376 = vmatprep.subr.bf16.mxu0 0
    %377 = vmatpush1.bf16.msra.mxu0 0
    %378 = vmatprep.subr.bf16.mxu0 0
    %379 = vmatpush1.bf16.msra.mxu0 0
    %380 = vmatprep.subr.bf16.mxu0 0
    %381 = vmatpush1.bf16.msra.mxu0 0
    %382 = vmatprep.mubr.bf16.mxu0 0
    %383 = vmatmul.mubr.bf16.gmra.mrb[0].mxu0 %v160
    %v384 = vpop.f32.mrb[0].mxu0
    %v385 = vadd.f32 %v336, %v384
    %v386 = vpop.f32.mrb[0].mxu0
    %v387 = vpop.f32.mrb[0].mxu0
    %v388 = vadd.f32 %v336, %v387
    %v389 = vpop.f32.mrb[0].mxu0
    %390 = vmatprep.mubr.bf16.mxu0 0
    %391 = vmatmul.mubr.bf16.gmra.mrb[0].mxu0 %v163
    %v392 = vpop.f32.mrb[0].mxu0
    %v393 = vadd.f32 %v336, %v392
    %v394 = vpop.f32.mrb[0].mxu0
    %v395 = vpop.f32.mrb[0].mxu0
    %v396 = vadd.f32 %v336, %v395
    %v397 = vpop.f32.mrb[0].mxu0
    %398 = vdwg.mxu0
    %v399 = vpack.c.bf16 %v388, %v385
    %v400 = vpack.c.bf16 %v396, %v393
    %v403 = vunpack.c.l.b16 %v399
    %v404 = vunpack.c.h.b16 %v399
    %v405 = vunpack.c.l.b16 %v400
    %v406 = vunpack.c.h.b16 %v400
    %v407 = vpack.c.b16 %v403, %v403
    %v408 = vpack.c.b16 %v404, %v404
    %v409 = vpack.c.b16 %v405, %v405
    %v410 = vpack.c.b16 %v406, %v406
    %415 = vst.msk [vmem:[#allocation17] sm:$0xf] %vm230, %v407
    %416 = vst.msk [vmem:[#allocation17 + $0x4] sm:$0xf] %vm230, %v408
    %417 = vst.msk [vmem:[#allocation17 + $0x8] sm:$0xf] %vm230, %v409
    %418 = vst.msk [vmem:[#allocation17 + $0xc] sm:$0xf] %vm230, %v410
    // Predicated region
    $region58: #{tpu_custom_call.1} parent=1 // pred_check
      _
    $region59: #{tpu_custom_call.1} parent=1 // pred_check_branch
      %420 = sbr.rel (0) target = $region61
    $region60: #{tpu_custom_call.1} parent=1 // pred_region
      %s422 = ssub.s32 256, 256
      %423 = vsyncadd [#allocation4], %s422
      %s424 = sshll.u32 [#allocation14], 4
      %s425 = int_to_ptr.vmem [resolvable:$true] %s424
      %430 = dma.vmem_to_hbm [thread:$0]  %s425, 256, %s7, [#allocation4], 64, 64, 4
    $region61: #{tpu_custom_call.1} parent=1 // pred_fallthru
      _
    // Predicated region
    $region62: #{tpu_custom_call.1} parent=1 // pred_check
      _
    $region63: #{tpu_custom_call.1} parent=1 // pred_check_branch
      %432 = sbr.rel (0) target = $region65
    $region64: #{tpu_custom_call.1} parent=1 // pred_region
      %s434 = ssub.s32 256, 256
      %435 = vsyncadd [#allocation16], %s434
      %s436 = sshll.u32 [#allocation15], 4
      %s437 = int_to_ptr.vmem [resolvable:$true] %s436
      %442 = dma.vmem_to_hbm [thread:$0]  %s437, 256, %s8, [#allocation16], 64, 64, 4
    $region65: #{tpu_custom_call.1} parent=1 // pred_fallthru
      _
    // Predicated region
    $region66: #{tpu_custom_call.1} parent=1 // pred_check
      _
    $region67: #{tpu_custom_call.1} parent=1 // pred_check_branch
      %444 = sbr.rel (0) target = $region69
    $region68: #{tpu_custom_call.1} parent=1 // pred_region
      %s446 = ssub.s32 256, 256
      %447 = vsyncadd [#allocation16], %s446
      %s448 = sshll.u32 [#allocation17], 4
      %s449 = int_to_ptr.vmem [resolvable:$true] %s448
      %454 = dma.vmem_to_hbm [thread:$0]  %s449, 256, %s9, [#allocation16], 64, 64, 4
    $region69: #{tpu_custom_call.1} parent=1 // pred_fallthru
      _
    // Predicated region
    $region70: #{tpu_custom_call.1} parent=1 // pred_check
      _
    $region71: #{tpu_custom_call.1} parent=1 // pred_check_branch
      %456 = sbr.rel (0) target = $region73
    $region72: #{tpu_custom_call.1} parent=1 // pred_region
      %457 = dma.done [#allocation4], 256
    $region73: #{tpu_custom_call.1} parent=1 // pred_fallthru
      _
    // Predicated region
    $region74: #{tpu_custom_call.1} parent=1 // pred_check
      _
    $region75: #{tpu_custom_call.1} parent=1 // pred_check_branch
      %459 = sbr.rel (0) target = $region77
    $region76: #{tpu_custom_call.1} parent=1 // pred_region
      %460 = dma.done [#allocation16], 256
    $region77: #{tpu_custom_call.1} parent=1 // pred_fallthru
      _
    // Predicated region
    $region78: #{tpu_custom_call.1} parent=1 // pred_check
      _
    $region79: #{tpu_custom_call.1} parent=1 // pred_check_branch
      %462 = sbr.rel (0) target = $region81
    $region80: #{tpu_custom_call.1} parent=1 // pred_region
      %463 = dma.done [#allocation16], 256
    $region81: #{tpu_custom_call.1} parent=1 // pred_fallthru
      _
    %464 = vsyncpa [#allocation3], 1
    %465 = vsyncpa [#allocation6], 1
    %466 = vsyncpa [#allocation9], 1
    %467 = vsyncpa [#allocation12], 1
    %468 = vsyncpa [#allocation4], 1
    %469 = vsyncpa [#allocation16], 1

</llo_original>
